<compile_context>
chip_gen: v7x
topology: tpu7x:2x2x1
jax: 0.10.0
libtpu: 0.0.40
codegen_flags: <defaults>
</compile_context>

<pallas_src>
import jax
import jax.numpy as jnp
from jax.experimental import pallas as pl
from jax.experimental.pallas import tpu as pltpu


def _round_up(x, m):
    return (x + m - 1) // m * m


def _pad_rows(a, n):
    if a.shape[0] == n:
        return a
    pad = jnp.zeros((n - a.shape[0],) + a.shape[1:], a.dtype)
    return jnp.concatenate([a, pad], axis=0)


# ----------------------------------------------------------------------------
# Kernels
# ----------------------------------------------------------------------------
def tsg_rnn_kernel_small(x_ref, h0_ref, w1_ref, b1_ref, wg_ref, bg_ref,
                         wo_ref, bo_ref, q_ref, h_ref):
    """H < 128 path: all six GRU gate matmuls fused into ONE (K=2H, N=4H) dot."""
    H = h0_ref.shape[-1]
    x = x_ref[...]                      # f32 (TB, IN)
    h0 = h0_ref[...]                    # f32 (TB, H)

    # fc1 + ReLU  (bf16 MXU operands, f32 accumulation)
    x1 = jnp.dot(x.astype(jnp.bfloat16), w1_ref[...],
                 preferred_element_type=jnp.float32) + b1_ref[...]
    x1 = jnp.maximum(x1, 0.0)

    # GRUCell: gates = [x1 | h0] @ [[Wir|Wiz|Win|0],[Whr|Whz|0|Whn]] + b
    # column layout [r | z | i_n | h_n] keeps the r * h_n coupling exact.
    xh = jnp.concatenate([x1, h0], axis=1).astype(jnp.bfloat16)       # (TB, 2H)
    gates = (jnp.dot(xh, wg_ref[...], preferred_element_type=jnp.float32)
             + bg_ref[...])
    r = jax.nn.sigmoid(gates[:, 0 * H:1 * H])
    z = jax.nn.sigmoid(gates[:, 1 * H:2 * H])
    n = jnp.tanh(gates[:, 2 * H:3 * H] + r * gates[:, 3 * H:4 * H])
    h = (1.0 - z) * n + z * h0

    # fused + lane-padded output heads: one dot, one lane-dense store.
    q = jnp.dot(h.astype(jnp.bfloat16), wo_ref[...],
                preferred_element_type=jnp.float32) + bo_ref[...]
    q_ref[...] = q.astype(q_ref.dtype)
    h_ref[...] = h.astype(h_ref.dtype)


def tsg_rnn_kernel_large(x_ref, h0_ref, w1_ref, b1_ref, wgx_ref, wgh_ref,
                         bgx_ref, bgh_ref, wo_ref, bo_ref, q_ref, h_ref):
    """3H % 128 == 0 path: zero-block-free gate dots, two (H, 3H) MXU dots."""
    H = h0_ref.shape[-1]
    x = x_ref[...]
    h0 = h0_ref[...]

    x1 = jnp.dot(x.astype(jnp.bfloat16), w1_ref[...],
                 preferred_element_type=jnp.float32) + b1_ref[...]
    x1 = jnp.maximum(x1, 0.0)

    gx = (jnp.dot(x1.astype(jnp.bfloat16), wgx_ref[...],
                  preferred_element_type=jnp.float32) + bgx_ref[...])
    gh = (jnp.dot(h0.astype(jnp.bfloat16), wgh_ref[...],
                  preferred_element_type=jnp.float32) + bgh_ref[...])
    r = jax.nn.sigmoid(gx[:, 0 * H:1 * H] + gh[:, 0 * H:1 * H])
    z = jax.nn.sigmoid(gx[:, 1 * H:2 * H] + gh[:, 1 * H:2 * H])
    n = jnp.tanh(gx[:, 2 * H:3 * H] + r * gh[:, 2 * H:3 * H])
    h = (1.0 - z) * n + z * h0

    q = jnp.dot(h.astype(jnp.bfloat16), wo_ref[...],
                preferred_element_type=jnp.float32) + bo_ref[...]
    q_ref[...] = q.astype(q_ref.dtype)
    h_ref[...] = h.astype(h_ref.dtype)


# ----------------------------------------------------------------------------
# One-time parameter fusion (call ONCE at init, not in the per-step forward).
# ----------------------------------------------------------------------------
def fuse_params(params, compute_dtype=jnp.bfloat16):
    H = params["fc1_w"].shape[1]
    IN = params["fc1_w"].shape[0]
    skip_dim = params["fc2_w"].shape[1]
    goal_dim = params["fc3_w"].shape[1]
    qd = skip_dim + goal_dim
    qd_pad = _round_up(qd, 128)          # lane-dense output store
    single_dot = (H < 128) or ((3 * H) % 128 != 0)

    fused = {
        "w1": params["fc1_w"].astype(compute_dtype),
        "b1": params["fc1_b"].astype(jnp.float32),
    }
    if single_dot:
        zero = jnp.zeros((H, H), jnp.float32)
        top = jnp.concatenate([params["w_ir"], params["w_iz"], params["w_in"], zero], axis=1)
        bot = jnp.concatenate([params["w_hr"], params["w_hz"], zero, params["w_hn"]], axis=1)
        fused["wg"] = jnp.concatenate([top, bot], axis=0).astype(compute_dtype)   # (2H, 4H)
        fused["bg"] = jnp.concatenate([params["b_ir"] + params["b_hr"],
                                       params["b_iz"] + params["b_hz"],
                                       params["b_in"],
                                       params["b_hn"]], axis=1).astype(jnp.float32)
    else:
        fused["wgx"] = jnp.concatenate(
            [params["w_ir"], params["w_iz"], params["w_in"]], axis=1).astype(compute_dtype)
        fused["wgh"] = jnp.concatenate(
            [params["w_hr"], params["w_hz"], params["w_hn"]], axis=1).astype(compute_dtype)
        fused["bgx"] = jnp.concatenate(
            [params["b_ir"], params["b_iz"], params["b_in"]], axis=1).astype(jnp.float32)
        fused["bgh"] = jnp.concatenate(
            [params["b_hr"], params["b_hz"], params["b_hn"]], axis=1).astype(jnp.float32)

    wo = jnp.concatenate([params["fc2_w"], params["fc3_w"]], axis=1)
    bo = jnp.concatenate([params["fc2_b"], params["fc3_b"]], axis=1)
    if qd_pad != qd:
        wo = jnp.pad(wo, ((0, 0), (0, qd_pad - qd)))
        bo = jnp.pad(bo, ((0, 0), (0, qd_pad - qd)))
    fused["wo"] = wo.astype(compute_dtype)
    fused["bo"] = bo.astype(jnp.float32)

    meta = dict(H=H, IN=IN, skip_dim=skip_dim, goal_dim=goal_dim,
                qd_pad=qd_pad, single_dot=single_dot)
    return fused, meta


# ----------------------------------------------------------------------------
# Forward builder (pre-fused weights are closed over; dims baked in as ints).
# ----------------------------------------------------------------------------
def build_forward(fused, meta):
    H, IN = meta["H"], meta["IN"]
    skip_dim, goal_dim = meta["skip_dim"], meta["goal_dim"]
    qd_pad = meta["qd_pad"]
    single_dot = meta["single_dot"]

    @jax.jit
    def forward(inputs, hidden_state):
        B = inputs.shape[0]
        x = inputs.astype(jnp.float32)
        if hidden_state is None:
            h0 = jnp.zeros((B, H), jnp.float32)
        else:
            h0 = hidden_state.reshape(-1, H).astype(jnp.float32)

        # Batch tiling: whole batch resident when tiny; else ensure >=2 grid
        # steps so ("parallel",) spans both TensorCores on v7x, TB capped at
        # 512 rows (double-buffered tiles stay well inside 64 MiB VMEM).
        B8 = _round_up(B, 8)
        if B8 <= 16:
            TB = B8
        else:
            TB = min(512, _round_up(pl.cdiv(B8, 2), 8))
        B_pad = _round_up(B8, TB)
        x_p = _pad_rows(x, B_pad)          # no-op when B is already aligned
        h0_p = _pad_rows(h0, B_pad)
        grid = (B_pad // TB,)

        def batched(cols):
            return pl.BlockSpec((TB, cols), lambda i: (i, 0))

        def full(shape):
            return pl.BlockSpec(shape, lambda i: (0, 0))

        if single_dot:
            kernel = tsg_rnn_kernel_small
            weight_args = (fused["w1"], fused["b1"], fused["wg"], fused["bg"],
                           fused["wo"], fused["bo"])
            weight_specs = [full((IN, H)), full((1, H)),
                            full((2 * H, 4 * H)), full((1, 4 * H)),
                            full((H, qd_pad)), full((1, qd_pad))]
            gate_flops = 2 * B_pad * (2 * H) * (4 * H)
            w_bytes = (IN * H + 2 * H * 4 * H + H * qd_pad) * 2 \
                      + (H + 4 * H + qd_pad) * 4
        else:
            kernel = tsg_rnn_kernel_large
            weight_args = (fused["w1"], fused["b1"], fused["wgx"], fused["wgh"],
                           fused["bgx"], fused["bgh"], fused["wo"], fused["bo"])
            weight_specs = [full((IN, H)), full((1, H)),
                            full((H, 3 * H)), full((H, 3 * H)),
                            full((1, 3 * H)), full((1, 3 * H)),
                            full((H, qd_pad)), full((1, qd_pad))]
            gate_flops = 2 * B_pad * H * (3 * H) * 2
            w_bytes = (IN * H + 2 * H * 3 * H + H * qd_pad) * 2 \
                      + (H + 6 * H + qd_pad) * 4

        cost = pl.CostEstimate(
            flops=2 * B_pad * (IN * H + H * qd_pad) + gate_flops,
            transcendentals=3 * B_pad * H,
            bytes_accessed=w_bytes + B_pad * (IN + 2 * H + qd_pad + H) * 4,
        )

        q_fused, h_new = pl.pallas_call(
            kernel,
            out_shape=(jax.ShapeDtypeStruct((B_pad, qd_pad), jnp.float32),
                       jax.ShapeDtypeStruct((B_pad, H), jnp.float32)),
            grid=grid,
            in_specs=[batched(IN), batched(H)] + weight_specs,
            out_specs=(batched(qd_pad), batched(H)),
            input_output_aliases={1: 1},        # h reuses h0's buffer
            compiler_params=pltpu.CompilerParams(
                dimension_semantics=("parallel",),
                vmem_limit_bytes=32 * 1024 * 1024),
            cost_estimate=cost,
        )(x_p, h0_p, *weight_args)

        q_skip = q_fused[:B, :skip_dim]
        q_goal = q_fused[:B, skip_dim:skip_dim + goal_dim]
        return q_skip, q_goal, h_new[:B]

    return forward


# ----------------------------------------------------------------------------
# Deterministic PyTorch-default-style init (Linear weights stored (in, out)).
# ----------------------------------------------------------------------------
def make_params(key, input_shape, hidden, skip_dim, goal_dim, n_agents, skip_hidden_dim):
    keys = jax.random.split(key, 16)

    def lin(k, fan_in, fan_out):
        bound = 1.0 / jnp.sqrt(jnp.float32(fan_in))
        kw, kb = jax.random.split(k)
        w = jax.random.uniform(kw, (fan_in, fan_out), jnp.float32, -bound, bound)
        b = jax.random.uniform(kb, (1, fan_out), jnp.float32, -bound, bound)
        return w, b

    p = {}
    p["fc1_w"], p["fc1_b"] = lin(keys[0], input_shape, hidden)
    p["fc2_w"], p["fc2_b"] = lin(keys[1], hidden, skip_dim)
    p["fc3_w"], p["fc3_b"] = lin(keys[2], hidden, goal_dim)

    gbound = 1.0 / jnp.sqrt(jnp.float32(hidden))
    names_i = ["w_ir", "w_iz", "w_in"]
    names_h = ["w_hr", "w_hz", "w_hn"]
    names_bi = ["b_ir", "b_iz", "b_in"]
    names_bh = ["b_hr", "b_hz", "b_hn"]
    for i in range(3):
        p[names_i[i]] = jax.random.uniform(keys[3 + i], (hidden, hidden), jnp.float32, -gbound, gbound)
        p[names_h[i]] = jax.random.uniform(keys[6 + i], (hidden, hidden), jnp.float32, -gbound, gbound)
        p[names_bi[i]] = jax.random.uniform(keys[9 + i], (1, hidden), jnp.float32, -gbound, gbound)
        p[names_bh[i]] = jax.random.uniform(keys[12 + i], (1, hidden), jnp.float32, -gbound, gbound)

    # `skip` layer is defined in __init__ but never used in forward().
    p["skip_w"], p["skip_b"] = lin(keys[15], n_agents, skip_hidden_dim)
    return p


def reference_forward(inputs, hidden_state, params):
    """Pure-JAX f32 reference of the PyTorch forward (un-fused per-gate params)."""
    H = params["fc1_w"].shape[1]
    h0 = hidden_state.reshape(-1, H)
    x1 = jax.nn.relu(inputs @ params["fc1_w"] + params["fc1_b"])
    i_r = x1 @ params["w_ir"] + params["b_ir"]
    i_z = x1 @ params["w_iz"] + params["b_iz"]
    i_n = x1 @ params["w_in"] + params["b_in"]
    h_r = h0 @ params["w_hr"] + params["b_hr"]
    h_z = h0 @ params["w_hz"] + params["b_hz"]
    h_n = h0 @ params["w_hn"] + params["b_hn"]
    r = jax.nn.sigmoid(i_r + h_r)
    z = jax.nn.sigmoid(i_z + h_z)
    n = jnp.tanh(i_n + r * h_n)
    h = (1.0 - z) * n + z * h0
    return h @ params["fc2_w"] + params["fc2_b"], h @ params["fc3_w"] + params["fc3_b"], h


def _run_case(key, B, IN, H, SKIP, GOAL, N_AGENTS, SKIP_HIDDEN):
    k_param, k_x, k_h = jax.random.split(key, 3)
    params = make_params(k_param, IN, H, SKIP, GOAL, N_AGENTS, SKIP_HIDDEN)
    inputs = jax.random.normal(k_x, (B, IN), jnp.float32)
    hidden_state = jax.random.normal(k_h, (B, 1, H), jnp.float32)

    fused, meta = fuse_params(params)          # ONCE, outside the hot path
    forward = build_forward(fused, meta)

    q_skip, q_goal, h = forward(inputs, hidden_state)
    jax.block_until_ready((q_skip, q_goal, h))

    rs, rg, rh = reference_forward(inputs, hidden_state, params)
    # bf16 MXU operands -> relaxed tolerance vs f32 reference.
    tol = dict(atol=2e-2, rtol=2e-2)
    assert q_skip.shape == (B, SKIP) and q_goal.shape == (B, GOAL) and h.shape == (B, H)
    assert jnp.allclose(q_skip, rs, **tol), "q_skip mismatch"
    assert jnp.allclose(q_goal, rg, **tol), "q_goal mismatch"
    assert jnp.allclose(h, rh, **tol), "h mismatch"


if __name__ == "__main__":
    key = jax.random.PRNGKey(0)
    k1, k2 = jax.random.split(key)

    # Case 1: small config matching the module args (single stacked gate dot,
    # H < 128, B aligned -> no padding copies, grid=(1,)).
    _run_case(k1, B=8, IN=64, H=32, SKIP=16, GOAL=16, N_AGENTS=4, SKIP_HIDDEN=8)

    # Case 2: lane-aligned H (3H % 128 == 0) exercising the zero-block-free
    # two-dot gate path, ragged batch (padding) and a 2-step parallel grid.
    _run_case(k2, B=24, IN=80, H=128, SKIP=11, GOAL=7, N_AGENTS=4, SKIP_HIDDEN=8)

    print("KERNEL_OK")
</pallas_src>

<mosaic_0001>
module attributes {stable_mosaic.version = 11 : i64} {
  func.func @tsg_rnn_kernel_small(%arg0: i32, %arg1: memref<8x64xf32, #tpu.memory_space<vmem>>, %arg2: memref<8x32xf32, #tpu.memory_space<vmem>>, %arg3: memref<64x32xbf16, #tpu.memory_space<vmem>>, %arg4: memref<1x32xf32, #tpu.memory_space<vmem>>, %arg5: memref<64x128xbf16, #tpu.memory_space<vmem>>, %arg6: memref<1x128xf32, #tpu.memory_space<vmem>>, %arg7: memref<32x128xbf16, #tpu.memory_space<vmem>>, %arg8: memref<1x128xf32, #tpu.memory_space<vmem>>, %arg9: memref<8x128xf32, #tpu.memory_space<vmem>>, %arg10: memref<8x32xf32, #tpu.memory_space<vmem>>) attributes {dimension_semantics = [#tpu.dimension_semantics<parallel>], iteration_bounds = array<i64: 1>, scalar_prefetch = 0 : i64, scratch_operands = 0 : i64, tpu.core_type = #tpu.core_type<tc>, window_params = [{transform_indices = @transform_0, window_bounds = array<i64: 8, 64>}, {transform_indices = @transform_1, window_bounds = array<i64: 8, 32>}, {pipeline_mode = #tpu.pipeline_mode<synchronous>, transform_indices = @transform_2, window_bounds = array<i64: 64, 32>}, {pipeline_mode = #tpu.pipeline_mode<synchronous>, transform_indices = @transform_3, window_bounds = array<i64: 1, 32>}, {pipeline_mode = #tpu.pipeline_mode<synchronous>, transform_indices = @transform_4, window_bounds = array<i64: 64, 128>}, {pipeline_mode = #tpu.pipeline_mode<synchronous>, transform_indices = @transform_5, window_bounds = array<i64: 1, 128>}, {pipeline_mode = #tpu.pipeline_mode<synchronous>, transform_indices = @transform_6, window_bounds = array<i64: 32, 128>}, {pipeline_mode = #tpu.pipeline_mode<synchronous>, transform_indices = @transform_7, window_bounds = array<i64: 1, 128>}, {transform_indices = @transform_8, window_bounds = array<i64: 8, 128>}, {transform_indices = @transform_9, window_bounds = array<i64: 8, 32>}]} {
    %c0 = arith.constant 0 : index
    %c0_0 = arith.constant 0 : index
    %0 = vector.load %arg1[%c0, %c0_0] : memref<8x64xf32, #tpu.memory_space<vmem>>, vector<8x64xf32>
    %c0_1 = arith.constant 0 : index
    %c0_2 = arith.constant 0 : index
    %1 = vector.load %arg2[%c0_1, %c0_2] : memref<8x32xf32, #tpu.memory_space<vmem>>, vector<8x32xf32>
    %2 = arith.truncf %0 : vector<8x64xf32> to vector<8x64xbf16>
    %c0_3 = arith.constant 0 : index
    %c0_4 = arith.constant 0 : index
    %3 = vector.load %arg3[%c0_3, %c0_4] : memref<64x32xbf16, #tpu.memory_space<vmem>>, vector<64x32xbf16>
    %cst = arith.constant dense<0.000000e+00> : vector<8x32xf32>
    %4 = tpu.matmul %2, %3, %cst {dimension_numbers = #tpu.dot_dimension_numbers<[1], [0], [0], [1], [0, 0, 1, 1], [], []>} : vector<8x64xbf16>, vector<64x32xbf16>, vector<8x32xf32> -> vector<8x32xf32>
    %c0_5 = arith.constant 0 : index
    %c0_6 = arith.constant 0 : index
    %5 = vector.load %arg4[%c0_5, %c0_6] : memref<1x32xf32, #tpu.memory_space<vmem>>, vector<1x32xf32>
    %6 = vector.broadcast %5 : vector<1x32xf32> to vector<8x32xf32>
    %7 = arith.addf %4, %6 : vector<8x32xf32>
    %cst_7 = arith.constant 0.000000e+00 : f32
    %8 = vector.broadcast %cst_7 : f32 to vector<8x32xf32>
    %9 = arith.maximumf %7, %8 : vector<8x32xf32>
    %10 = tpu.concatenate %9, %1 in 1 : vector<8x32xf32>, vector<8x32xf32> -> vector<8x64xf32>
    %11 = arith.truncf %10 : vector<8x64xf32> to vector<8x64xbf16>
    %c0_8 = arith.constant 0 : index
    %c0_9 = arith.constant 0 : index
    %12 = vector.load %arg5[%c0_8, %c0_9] : memref<64x128xbf16, #tpu.memory_space<vmem>>, vector<64x128xbf16>
    %cst_10 = arith.constant dense<0.000000e+00> : vector<8x128xf32>
    %13 = tpu.matmul %11, %12, %cst_10 {dimension_numbers = #tpu.dot_dimension_numbers<[1], [0], [0], [1], [0, 0, 1, 1], [], []>} : vector<8x64xbf16>, vector<64x128xbf16>, vector<8x128xf32> -> vector<8x128xf32>
    %c0_11 = arith.constant 0 : index
    %c0_12 = arith.constant 0 : index
    %14 = vector.load %arg6[%c0_11, %c0_12] : memref<1x128xf32, #tpu.memory_space<vmem>>, vector<1x128xf32>
    %15 = vector.broadcast %14 : vector<1x128xf32> to vector<8x128xf32>
    %16 = arith.addf %13, %15 : vector<8x128xf32>
    %17 = vector.extract_strided_slice %16 {offsets = [0, 0], sizes = [8, 32], strides = [1, 1]} : vector<8x128xf32> to vector<8x32xf32>
    %18 = arith.negf %17 : vector<8x32xf32>
    %19 = math.exp %18 : vector<8x32xf32>
    %cst_13 = arith.constant 1.000000e+00 : f32
    %20 = vector.broadcast %cst_13 : f32 to vector<8x32xf32>
    %21 = arith.addf %20, %19 : vector<8x32xf32>
    %22 = arith.divf %20, %21 : vector<8x32xf32>
    %23 = vector.extract_strided_slice %16 {offsets = [0, 32], sizes = [8, 32], strides = [1, 1]} : vector<8x128xf32> to vector<8x32xf32>
    %24 = arith.negf %23 : vector<8x32xf32>
    %25 = math.exp %24 : vector<8x32xf32>
    %cst_14 = arith.constant 1.000000e+00 : f32
    %26 = vector.broadcast %cst_14 : f32 to vector<8x32xf32>
    %27 = arith.addf %26, %25 : vector<8x32xf32>
    %28 = arith.divf %26, %27 : vector<8x32xf32>
    %29 = vector.extract_strided_slice %16 {offsets = [0, 64], sizes = [8, 32], strides = [1, 1]} : vector<8x128xf32> to vector<8x32xf32>
    %30 = vector.extract_strided_slice %16 {offsets = [0, 96], sizes = [8, 32], strides = [1, 1]} : vector<8x128xf32> to vector<8x32xf32>
    %31 = arith.mulf %22, %30 : vector<8x32xf32>
    %32 = arith.addf %29, %31 : vector<8x32xf32>
    %33 = math.tanh %32 : vector<8x32xf32>
    %cst_15 = arith.constant 1.000000e+00 : f32
    %34 = vector.broadcast %cst_15 : f32 to vector<8x32xf32>
    %35 = arith.subf %34, %28 : vector<8x32xf32>
    %36 = arith.mulf %35, %33 : vector<8x32xf32>
    %37 = arith.mulf %28, %1 : vector<8x32xf32>
    %38 = arith.addf %36, %37 : vector<8x32xf32>
    %39 = arith.truncf %38 : vector<8x32xf32> to vector<8x32xbf16>
    %c0_16 = arith.constant 0 : index
    %c0_17 = arith.constant 0 : index
    %40 = vector.load %arg7[%c0_16, %c0_17] : memref<32x128xbf16, #tpu.memory_space<vmem>>, vector<32x128xbf16>
    %cst_18 = arith.constant dense<0.000000e+00> : vector<8x128xf32>
    %41 = tpu.matmul %39, %40, %cst_18 {dimension_numbers = #tpu.dot_dimension_numbers<[1], [0], [0], [1], [0, 0, 1, 1], [], []>} : vector<8x32xbf16>, vector<32x128xbf16>, vector<8x128xf32> -> vector<8x128xf32>
    %c0_19 = arith.constant 0 : index
    %c0_20 = arith.constant 0 : index
    %42 = vector.load %arg8[%c0_19, %c0_20] : memref<1x128xf32, #tpu.memory_space<vmem>>, vector<1x128xf32>
    %43 = vector.broadcast %42 : vector<1x128xf32> to vector<8x128xf32>
    %44 = arith.addf %41, %43 : vector<8x128xf32>
    %c0_21 = arith.constant 0 : index
    %c0_22 = arith.constant 0 : index
    %45 = vector.load %arg9[%c0_21, %c0_22] : memref<8x128xf32, #tpu.memory_space<vmem>>, vector<8x128xf32>
    tpu.vector_store %arg9[%c0_21, %c0_22], %44 {strides = array<i32>} : memref<8x128xf32, #tpu.memory_space<vmem>>, vector<8x128xf32>,
    %c0_23 = arith.constant 0 : index
    %c0_24 = arith.constant 0 : index
    %46 = vector.load %arg10[%c0_23, %c0_24] : memref<8x32xf32, #tpu.memory_space<vmem>>, vector<8x32xf32>
    tpu.vector_store %arg10[%c0_23, %c0_24], %38 {strides = array<i32>} : memref<8x32xf32, #tpu.memory_space<vmem>>, vector<8x32xf32>,
    return
  }
  func.func @transform_0(%arg0: i32) -> (i32, i32) {
    %c0_i32 = arith.constant 0 : i32
    %c0_i32_0 = arith.constant 0 : i32
    return %arg0, %c0_i32 : i32, i32
  }
  func.func @transform_1(%arg0: i32) -> (i32, i32) {
    %c0_i32 = arith.constant 0 : i32
    %c0_i32_0 = arith.constant 0 : i32
    return %arg0, %c0_i32 : i32, i32
  }
  func.func @transform_2(%arg0: i32) -> (i32, i32) {
    %c0_i32 = arith.constant 0 : i32
    %c0_i32_0 = arith.constant 0 : i32
    %c0_i32_1 = arith.constant 0 : i32
    return %c0_i32, %c0_i32_0 : i32, i32
  }
  func.func @transform_3(%arg0: i32) -> (i32, i32) {
    %c0_i32 = arith.constant 0 : i32
    %c0_i32_0 = arith.constant 0 : i32
    %c0_i32_1 = arith.constant 0 : i32
    return %c0_i32, %c0_i32_0 : i32, i32
  }
  func.func @transform_4(%arg0: i32) -> (i32, i32) {
    %c0_i32 = arith.constant 0 : i32
    %c0_i32_0 = arith.constant 0 : i32
    %c0_i32_1 = arith.constant 0 : i32
    return %c0_i32, %c0_i32_0 : i32, i32
  }
  func.func @transform_5(%arg0: i32) -> (i32, i32) {
    %c0_i32 = arith.constant 0 : i32
    %c0_i32_0 = arith.constant 0 : i32
    %c0_i32_1 = arith.constant 0 : i32
    return %c0_i32, %c0_i32_0 : i32, i32
  }
  func.func @transform_6(%arg0: i32) -> (i32, i32) {
    %c0_i32 = arith.constant 0 : i32
    %c0_i32_0 = arith.constant 0 : i32
    %c0_i32_1 = arith.constant 0 : i32
    return %c0_i32, %c0_i32_0 : i32, i32
  }
  func.func @transform_7(%arg0: i32) -> (i32, i32) {
    %c0_i32 = arith.constant 0 : i32
    %c0_i32_0 = arith.constant 0 : i32
    %c0_i32_1 = arith.constant 0 : i32
    return %c0_i32, %c0_i32_0 : i32, i32
  }
  func.func @transform_8(%arg0: i32) -> (i32, i32) {
    %c0_i32 = arith.constant 0 : i32
    %c0_i32_0 = arith.constant 0 : i32
    return %arg0, %c0_i32 : i32, i32
  }
  func.func @transform_9(%arg0: i32) -> (i32, i32) {
    %c0_i32 = arith.constant 0 : i32
    %c0_i32_0 = arith.constant 0 : i32
    return %arg0, %c0_i32 : i32, i32
  }
}

</mosaic_0001>

<llo_original>
// kernel: forward.1
$region0: #{forward.1}
  #allocation0 [shape = 'u32[]', space=smem, size = 0x4, offset = 0x4, fixed_abs, tag = 'smem constant byte address 0x4 - core index']
  #allocation1 [shape = 'u32[144,128]{1,0:T(1,128)}', space=vmem, size = 0x12000, scoped, tag = 'internal scratch']
  %s0 = inlined_call_operand.hbm [shape: f32[8,64], index: 0, kind: input, shape index: {}]
  %s1 = inlined_call_operand.vmem [shape: f32[8,32], index: 1, kind: input, shape index: {}, may-alias: {1,9}]
  %s2 = inlined_call_operand.hbm [shape: bf16[64,32], index: 2, kind: input, shape index: {}]
  %s3 = inlined_call_operand.hbm [shape: f32[1,32], index: 3, kind: input, shape index: {}]
  %s4 = inlined_call_operand.vmem [shape: bf16[64,128], index: 4, kind: input, shape index: {}]
  %s5 = inlined_call_operand.hbm [shape: f32[1,128], index: 5, kind: input, shape index: {}]
  %s6 = inlined_call_operand.vmem [shape: bf16[32,128], index: 6, kind: input, shape index: {}]
  %s7 = inlined_call_operand.vmem [shape: f32[1,128], index: 7, kind: input, shape index: {}]
  %s8 = inlined_call_operand.vmem [shape: f32[8,128], index: 8, kind: output, shape index: {0}]
  %s9 = inlined_call_operand.vmem [shape: f32[8,32], index: 9, kind: output, shape index: {1}, may-alias: {1,9}]
  %10 = xla_tuple %s8, %s9
  %s11 = sld [smem:[#allocation0]]
  $region66: #{forward.1} parent=0
    _
  %s13 = ssub.s32 1, %s11
  %s14 = scalar_select 0, %s13, %s11
  $region1: #{forward.1} parent=0
    #allocation2 [shape = 'u8[4096]{0}', space=vmem, size = 0x1000, scoped, tag = 'input window, operand 0, single buffered']
    #allocation3 [shape = 's32[1]{0}', space=sflag, size = 0x4, scoped, tag = 'scoped memory for forward.1']
    #allocation4 [shape = 'u8[16384]{0}', space=vmem, size = 0x4000, scoped, tag = 'input window, operand 2, single buffered']
    #allocation5 [shape = 's32[1]{0}', space=sflag, size = 0x4, scoped, tag = 'scoped memory for forward.1']
    #allocation6 [shape = 'u8[512]{0}', space=vmem, size = 0x400, scoped, tag = 'input window, operand 3, single buffered']
    #allocation7 [shape = 'u8[512]{0}', space=vmem, size = 0x400, scoped, tag = 'input window, operand 5, single buffered']
    #allocation8 [shape = 's32[1]{0}', space=sflag, size = 0x4, scoped, tag = 'scoped memory for forward.1']
    %15 = vsyncpa [#allocation3], 0
    %16 = vsyncpa [#allocation5], 0
    %17 = vsyncpa [#allocation8], 0
    // Predicated region
    $region2: #{forward.1} parent=1 // pred_check
      _
    $region3: #{forward.1} parent=1 // pred_check_branch
      %19 = sbr.rel (0) target = $region5
    $region4: #{forward.1} parent=1 // pred_region
      %s21 = ssub.s32 128, 128
      %22 = vsyncadd [#allocation3], %s21
      %s24 = sshll.u32 [#allocation2], 4
      %s25 = int_to_ptr.vmem [resolvable:$true] %s24
      %27 = dma.hbm_to_vmem [thread:$0]  %s0, 128, %s25, [#allocation3]
    $region5: #{forward.1} parent=1 // pred_fallthru
      _
    // Predicated region
    $region6: #{forward.1} parent=1 // pred_check
      _
    $region7: #{forward.1} parent=1 // pred_check_branch
      %29 = sbr.rel (0) target = $region9
    $region8: #{forward.1} parent=1 // pred_region
      _
    $region9: #{forward.1} parent=1 // pred_fallthru
      _
    // Predicated region
    $region10: #{forward.1} parent=1 // pred_check
      _
    $region11: #{forward.1} parent=1 // pred_check_branch
      %31 = sbr.rel (0) target = $region13
    $region12: #{forward.1} parent=1 // pred_region
      %s33 = ssub.s32 512, 512
      %34 = vsyncadd [#allocation5], %s33
      %s35 = sshll.u32 [#allocation4], 4
      %s36 = int_to_ptr.vmem [resolvable:$true] %s35
      %41 = dma.hbm_to_vmem [thread:$0]  %s2, 512, %s36, [#allocation5], 64, 64, 4
    $region13: #{forward.1} parent=1 // pred_fallthru
      _
    // Predicated region
    $region14: #{forward.1} parent=1 // pred_check
      _
    $region15: #{forward.1} parent=1 // pred_check_branch
      %43 = sbr.rel (0) target = $region17
    $region16: #{forward.1} parent=1 // pred_region
      %s45 = ssub.s32 16, 16
      %46 = vsyncadd [#allocation5], %s45
      %s48 = sshll.u32 [#allocation6], 4
      %s49 = int_to_ptr.vmem [resolvable:$true] %s48
      %51 = dma.hbm_to_vmem [thread:$0]  %s3, 16, %s49, [#allocation5]
    $region17: #{forward.1} parent=1 // pred_fallthru
      _
    // Predicated region
    $region18: #{forward.1} parent=1 // pred_check
      _
    $region19: #{forward.1} parent=1 // pred_check_branch
      %53 = sbr.rel (0) target = $region21
    $region20: #{forward.1} parent=1 // pred_region
      _
    $region21: #{forward.1} parent=1 // pred_fallthru
      _
    // Predicated region
    $region22: #{forward.1} parent=1 // pred_check
      _
    $region23: #{forward.1} parent=1 // pred_check_branch
      %55 = sbr.rel (0) target = $region25
    $region24: #{forward.1} parent=1 // pred_region
      %s57 = ssub.s32 16, 16
      %58 = vsyncadd [#allocation8], %s57
      %s60 = sshll.u32 [#allocation7], 4
      %s61 = int_to_ptr.vmem [resolvable:$true] %s60
      %63 = dma.hbm_to_vmem [thread:$0]  %s5, 16, %s61, [#allocation8]
    $region25: #{forward.1} parent=1 // pred_fallthru
      _
    // Predicated region
    $region26: #{forward.1} parent=1 // pred_check
      _
    $region27: #{forward.1} parent=1 // pred_check_branch
      %65 = sbr.rel (0) target = $region29
    $region28: #{forward.1} parent=1 // pred_region
      _
    $region29: #{forward.1} parent=1 // pred_fallthru
      _
    // Predicated region
    $region30: #{forward.1} parent=1 // pred_check
      _
    $region31: #{forward.1} parent=1 // pred_check_branch
      %67 = sbr.rel (0) target = $region33
    $region32: #{forward.1} parent=1 // pred_region
      _
    $region33: #{forward.1} parent=1 // pred_fallthru
      _
    // Predicated region
    $region34: #{forward.1} parent=1 // pred_check
      _
    $region35: #{forward.1} parent=1 // pred_check_branch
      %69 = sbr.rel (0) target = $region37
    $region36: #{forward.1} parent=1 // pred_region
      %70 = dma.done [#allocation3], 128
    $region37: #{forward.1} parent=1 // pred_fallthru
      _
    // Predicated region
    $region38: #{forward.1} parent=1 // pred_check
      _
    $region39: #{forward.1} parent=1 // pred_check_branch
      %72 = sbr.rel (0) target = $region41
    $region40: #{forward.1} parent=1 // pred_region
      %73 = dma.done [#allocation5], 512
    $region41: #{forward.1} parent=1 // pred_fallthru
      _
    // Predicated region
    $region42: #{forward.1} parent=1 // pred_check
      _
    $region43: #{forward.1} parent=1 // pred_check_branch
      %75 = sbr.rel (0) target = $region45
    $region44: #{forward.1} parent=1 // pred_region
      %76 = dma.done [#allocation5], 16
    $region45: #{forward.1} parent=1 // pred_fallthru
      _
    // Predicated region
    $region46: #{forward.1} parent=1 // pred_check
      _
    $region47: #{forward.1} parent=1 // pred_check_branch
      %78 = sbr.rel (0) target = $region49
    $region48: #{forward.1} parent=1 // pred_region
      %79 = dma.done [#allocation8], 16
    $region49: #{forward.1} parent=1 // pred_fallthru
      _
    %v81 = vld [vmem:[#allocation2] sm:$0xff]
    %v82 = vld [vmem:[%s1] sm:$0xff]
    %v83 = vpack.c.bf16 %v81, %v81
    %v84 = vld [vmem:[#allocation4] sm:$0xf]
    %v85 = vld [vmem:[#allocation4 + $0x4] sm:$0xf]
    %v86 = vld [vmem:[#allocation4 + $0x8] sm:$0xf]
    %v87 = vld [vmem:[#allocation4 + $0xc] sm:$0xf]
    %v88 = vld [vmem:[#allocation4 + $0x10] sm:$0xf]
    %v89 = vld [vmem:[#allocation4 + $0x14] sm:$0xf]
    %v90 = vld [vmem:[#allocation4 + $0x18] sm:$0xf]
    %v91 = vld [vmem:[#allocation4 + $0x1c] sm:$0xf]
    %v92 = vld [vmem:[#allocation6] sm:$0x1]
    %v94 = vlaneseq
    %v95 = vshrl.u32 %v94, 7
    %v96 = vsub.s32 0, %v95
    %v97 = vrot.slane %v92, %v96
    %v107 = vunpack.c.l.b16 %v84
    %v108 = vunpack.c.l.b16 %v85
    %v109 = vunpack.c.l.b16 %v86
    %v110 = vunpack.c.l.b16 %v87
    %v111 = vunpack.c.l.b16 %v88
    %v112 = vunpack.c.l.b16 %v89
    %v113 = vunpack.c.l.b16 %v90
    %v114 = vunpack.c.l.b16 %v91
    %v115 = vpack.c.b16 %v108, %v107
    %v116 = vpack.c.b16 %v110, %v109
    %v117 = vpack.c.b16 %v112, %v111
    %v118 = vpack.c.b16 %v114, %v113
    %vm123 = vcmask 523264
    %v125 = vsel %vm123, %v83, 0
    %127 = vmatprep.subr.bf16.mxu0 0
    %128 = vmatpush1.bf16.msra.mxu0 %v115
    %129 = vmatprep.subr.bf16.mxu0 0
    %130 = vmatpush1.bf16.msra.mxu0 %v116
    %131 = vmatprep.subr.bf16.mxu0 0
    %132 = vmatpush1.bf16.msra.mxu0 %v117
    %133 = vmatprep.subr.bf16.mxu0 0
    %134 = vmatpush1.bf16.msra.mxu0 %v118
    %135 = vmatprep.subr.bf16.mxu0 0
    %136 = vmatpush1.bf16.msra.mxu0 0
    %137 = vmatprep.subr.bf16.mxu0 0
    %138 = vmatpush1.bf16.msra.mxu0 0
    %139 = vmatprep.subr.bf16.mxu0 0
    %140 = vmatpush1.bf16.msra.mxu0 0
    %141 = vmatprep.subr.bf16.mxu0 0
    %142 = vmatpush1.bf16.msra.mxu0 0
    %143 = vmatprep.subr.bf16.mxu0 0
    %144 = vmatpush1.bf16.msra.mxu0 0
    %145 = vmatprep.subr.bf16.mxu0 0
    %146 = vmatpush1.bf16.msra.mxu0 0
    %147 = vmatprep.subr.bf16.mxu0 0
    %148 = vmatpush1.bf16.msra.mxu0 0
    %149 = vmatprep.subr.bf16.mxu0 0
    %150 = vmatpush1.bf16.msra.mxu0 0
    %151 = vmatprep.subr.bf16.mxu0 0
    %152 = vmatpush1.bf16.msra.mxu0 0
    %153 = vmatprep.subr.bf16.mxu0 0
    %154 = vmatpush1.bf16.msra.mxu0 0
    %155 = vmatprep.subr.bf16.mxu0 0
    %156 = vmatpush1.bf16.msra.mxu0 0
    %157 = vmatprep.subr.bf16.mxu0 0
    %158 = vmatpush1.bf16.msra.mxu0 0
    %159 = vmatprep.mubr.bf16.mxu0 0
    %160 = vmatmul.mubr.bf16.gmra.mrb[0].mxu0 %v125
    %v161 = vpop.f32.mrb[0].mxu0
    %v162 = vadd.f32 %v97, %v161
    %v163 = vpop.f32.mrb[0].mxu0
    %v164 = vpop.f32.mrb[0].mxu0
    %v165 = vpop.f32.mrb[0].mxu0
    %166 = vdwg.mxu0
    %v167 = vmax.f32 %v162, 0.0
    %169 = vrot.lane.b32.xlu0 %v82, 32
    %v170 = vpop.permute.xlu0 %169
    %vm172 = vcmask 261120
    %v173 = vsel %vm172, %v167, %v170
    %v174 = vpack.c.bf16 %v173, %v173
    %v175 = vld [vmem:[%s4] sm:$0xf]
    %v176 = vld [vmem:[%s4 + $0x4] sm:$0xf]
    %v177 = vld [vmem:[%s4 + $0x8] sm:$0xf]
    %v178 = vld [vmem:[%s4 + $0xc] sm:$0xf]
    %v179 = vld [vmem:[%s4 + $0x10] sm:$0xf]
    %v180 = vld [vmem:[%s4 + $0x14] sm:$0xf]
    %v181 = vld [vmem:[%s4 + $0x18] sm:$0xf]
    %v182 = vld [vmem:[%s4 + $0x1c] sm:$0xf]
    %v183 = vld [vmem:[#allocation7] sm:$0x1]
    %v185 = vlaneseq
    %v186 = vshrl.u32 %v185, 7
    %v187 = vsub.s32 0, %v186
    %v188 = vrot.slane %v183, %v187
    %v198 = vunpack.c.l.b16 %v175
    %v199 = vunpack.c.l.b16 %v176
    %v200 = vunpack.c.l.b16 %v177
    %v201 = vunpack.c.l.b16 %v178
    %v202 = vunpack.c.l.b16 %v179
    %v203 = vunpack.c.l.b16 %v180
    %v204 = vunpack.c.l.b16 %v181
    %v205 = vunpack.c.l.b16 %v182
    %v206 = vpack.c.b16 %v199, %v198
    %v207 = vpack.c.b16 %v201, %v200
    %v208 = vpack.c.b16 %v203, %v202
    %v209 = vpack.c.b16 %v205, %v204
    %v215 = vsel %vm123, %v174, 0
    %217 = vmatprep.subr.bf16.mxu0 0
    %218 = vmatpush1.bf16.msra.mxu0 %v206
    %219 = vmatprep.subr.bf16.mxu0 0
    %220 = vmatpush1.bf16.msra.mxu0 %v207
    %221 = vmatprep.subr.bf16.mxu0 0
    %222 = vmatpush1.bf16.msra.mxu0 %v208
    %223 = vmatprep.subr.bf16.mxu0 0
    %224 = vmatpush1.bf16.msra.mxu0 %v209
    %225 = vmatprep.subr.bf16.mxu0 0
    %226 = vmatpush1.bf16.msra.mxu0 0
    %227 = vmatprep.subr.bf16.mxu0 0
    %228 = vmatpush1.bf16.msra.mxu0 0
    %229 = vmatprep.subr.bf16.mxu0 0
    %230 = vmatpush1.bf16.msra.mxu0 0
    %231 = vmatprep.subr.bf16.mxu0 0
    %232 = vmatpush1.bf16.msra.mxu0 0
    %233 = vmatprep.subr.bf16.mxu0 0
    %234 = vmatpush1.bf16.msra.mxu0 0
    %235 = vmatprep.subr.bf16.mxu0 0
    %236 = vmatpush1.bf16.msra.mxu0 0
    %237 = vmatprep.subr.bf16.mxu0 0
    %238 = vmatpush1.bf16.msra.mxu0 0
    %239 = vmatprep.subr.bf16.mxu0 0
    %240 = vmatpush1.bf16.msra.mxu0 0
    %241 = vmatprep.subr.bf16.mxu0 0
    %242 = vmatpush1.bf16.msra.mxu0 0
    %243 = vmatprep.subr.bf16.mxu0 0
    %244 = vmatpush1.bf16.msra.mxu0 0
    %245 = vmatprep.subr.bf16.mxu0 0
    %246 = vmatpush1.bf16.msra.mxu0 0
    %247 = vmatprep.subr.bf16.mxu0 0
    %248 = vmatpush1.bf16.msra.mxu0 0
    %249 = vmatprep.mubr.bf16.mxu0 0
    %250 = vmatmul.mubr.bf16.gmra.mrb[0].mxu0 %v215
    %v251 = vpop.f32.mrb[0].mxu0
    %v252 = vadd.f32 %v188, %v251
    %v253 = vpop.f32.mrb[0].mxu0
    %v254 = vpop.f32.mrb[0].mxu0
    %v255 = vpop.f32.mrb[0].mxu0
    %256 = vdwg.mxu0
    %v257 = vxor.u32 %v252, 2147483648
    %v258 = vmul.f32 %v257, 1.442695
    %v259 = vpow.pop %v258
    %v260 = vadd.f32 %v259, 1.0
    %v261 = vrcp.pop %v260
    %v262 = vmul.f32 1.0, %v261
    %264 = vrot.lane.b32.xlu0 %v252, 32
    %v265 = vpop.permute.xlu0 %264
    %v267 = vmul.f32 %v262, %v265
    %269 = vrot.lane.b32.xlu0 %v267, 64
    %v270 = vpop.permute.xlu0 %269
    %v272 = vadd.f32 %v252, %v270
    %v273 = vtanh.pop %v272
    %v274 = vsub.f32 1.0, %v262
    %276 = vrot.lane.b32.xlu0 %v273, 96
    %v277 = vpop.permute.xlu0 %276
    %v279 = vmul.f32 %v274, %v277
    %v280 = vmul.f32 %v262, %v170
    %v281 = vadd.f32 %v279, %v280
    %v282 = vpack.c.bf16 %v281, %v281
    %v283 = vld [vmem:[%s6] sm:$0xf]
    %v284 = vld [vmem:[%s6 + $0x4] sm:$0xf]
    %v285 = vld [vmem:[%s6 + $0x8] sm:$0xf]
    %v286 = vld [vmem:[%s6 + $0xc] sm:$0xf]
    %v287 = vld [vmem:[%s7] sm:$0x1]
    %v289 = vlaneseq
    %v290 = vshrl.u32 %v289, 7
    %v291 = vsub.s32 0, %v290
    %v292 = vrot.slane %v287, %v291
    %295 = vrot.lane.b32.xlu0 %v282, 96
    %v296 = vpop.permute.xlu0 %295
    %v301 = vunpack.c.l.b16 %v283
    %v302 = vunpack.c.l.b16 %v284
    %v303 = vunpack.c.l.b16 %v285
    %v304 = vunpack.c.l.b16 %v286
    %v305 = vpack.c.b16 %v302, %v301
    %v306 = vpack.c.b16 %v304, %v303
    %v310 = vsel %vm172, %v296, 0
    %312 = vmatprep.subr.bf16.mxu0 0
    %313 = vmatpush1.bf16.msra.mxu0 %v305
    %314 = vmatprep.subr.bf16.mxu0 0
    %315 = vmatpush1.bf16.msra.mxu0 %v306
    %316 = vmatprep.subr.bf16.mxu0 0
    %317 = vmatpush1.bf16.msra.mxu0 0
    %318 = vmatprep.subr.bf16.mxu0 0
    %319 = vmatpush1.bf16.msra.mxu0 0
    %320 = vmatprep.subr.bf16.mxu0 0
    %321 = vmatpush1.bf16.msra.mxu0 0
    %322 = vmatprep.subr.bf16.mxu0 0
    %323 = vmatpush1.bf16.msra.mxu0 0
    %324 = vmatprep.subr.bf16.mxu0 0
    %325 = vmatpush1.bf16.msra.mxu0 0
    %326 = vmatprep.subr.bf16.mxu0 0
    %327 = vmatpush1.bf16.msra.mxu0 0
    %328 = vmatprep.subr.bf16.mxu0 0
    %329 = vmatpush1.bf16.msra.mxu0 0
    %330 = vmatprep.subr.bf16.mxu0 0
    %331 = vmatpush1.bf16.msra.mxu0 0
    %332 = vmatprep.subr.bf16.mxu0 0
    %333 = vmatpush1.bf16.msra.mxu0 0
    %334 = vmatprep.subr.bf16.mxu0 0
    %335 = vmatpush1.bf16.msra.mxu0 0
    %336 = vmatprep.subr.bf16.mxu0 0
    %337 = vmatpush1.bf16.msra.mxu0 0
    %338 = vmatprep.subr.bf16.mxu0 0
    %339 = vmatpush1.bf16.msra.mxu0 0
    %340 = vmatprep.subr.bf16.mxu0 0
    %341 = vmatpush1.bf16.msra.mxu0 0
    %342 = vmatprep.subr.bf16.mxu0 0
    %343 = vmatpush1.bf16.msra.mxu0 0
    %344 = vmatprep.mubr.bf16.mxu0 0
    %345 = vmatmul.mubr.bf16.gmra.mrb[0].mxu0 %v310
    %v346 = vpop.f32.mrb[0].mxu0
    %v347 = vadd.f32 %v292, %v346
    %v348 = vpop.f32.mrb[0].mxu0
    %v349 = vpop.f32.mrb[0].mxu0
    %v350 = vpop.f32.mrb[0].mxu0
    %351 = vdwg.mxu0
    %352 = vst [vmem:[%s8] sm:$0xff] %v347
    %354 = vrot.lane.b32.xlu0 %v281, 96
    %v355 = vpop.permute.xlu0 %354
    %357 = vst.msk [vmem:[%s9] sm:$0xff] %vm172, %v355
    // Predicated region
    $region50: #{forward.1} parent=1 // pred_check
      _
    $region51: #{forward.1} parent=1 // pred_check_branch
      %359 = sbr.rel (0) target = $region53
    $region52: #{forward.1} parent=1 // pred_region
      _
    $region53: #{forward.1} parent=1 // pred_fallthru
      _
    // Predicated region
    $region54: #{forward.1} parent=1 // pred_check
      _
    $region55: #{forward.1} parent=1 // pred_check_branch
      %361 = sbr.rel (0) target = $region57
    $region56: #{forward.1} parent=1 // pred_region
      _
    $region57: #{forward.1} parent=1 // pred_fallthru
      _
    // Predicated region
    $region58: #{forward.1} parent=1 // pred_check
      _
    $region59: #{forward.1} parent=1 // pred_check_branch
      %363 = sbr.rel (0) target = $region61
    $region60: #{forward.1} parent=1 // pred_region
      _
    $region61: #{forward.1} parent=1 // pred_fallthru
      _
    // Predicated region
    $region62: #{forward.1} parent=1 // pred_check
      _
    $region63: #{forward.1} parent=1 // pred_check_branch
      %365 = sbr.rel (0) target = $region65
    $region64: #{forward.1} parent=1 // pred_region
      _
    $region65: #{forward.1} parent=1 // pred_fallthru
      _
    %366 = vsyncpa [#allocation3], 1
    %367 = vsyncpa [#allocation5], 1
    %368 = vsyncpa [#allocation8], 1

</llo_original>
